<compile_context>
chip_gen: v6e
topology: v6e:2x2x1
jax: 0.10.0
libtpu: 0.0.40
codegen_flags: <defaults>
</compile_context>

<pallas_src>
import functools

import jax
import jax.numpy as jnp
from jax import lax
from jax.experimental import pallas as pl
from jax.experimental.pallas import tpu as pltpu


def fusion_down_kernel(x_ref, w_ref, p_ref, a_ref, b_ref, g_ref, beta_ref, o_ref,
                       *, bb, conv_first):
    """One batch block (bb stacked batches) per grid step.

    x_ref:    (bb*C_in, L)         f32   stacked inputs (rows = (batch, channel))
    w_ref:    (bb*C_out, bb*C_in)  bf16  block-diagonal conv weight
    p_ref:    (L, T)               bf16  avg-pool matrix (entries 0 or 1/C_out)
    a_ref:    (bb*C_out, bb*C_out) f32   LN block-averaging matrix (0 or 1/(C_out*T))
    b_ref:    (C_out, 1)           f32   conv bias (untiled)
    g_ref:    (C_out, T)           f32   LN gamma  (untiled)
    beta_ref: (C_out, T)           f32   LN beta   (untiled)
    o_ref:    (bb*C_out, T)        f32
    """
    # Cast the f32 input to bf16 on the VPU right before the MXU op (hidden
    # under DMA/MXU; avoids a separate un-fused XLA cast pass over x in HBM).
    x = x_ref[...].astype(jnp.bfloat16)
    w = w_ref[...]
    p = p_ref[...]

    if conv_first:
        # C_out <= C_in: Conv1d(k=1) for all bb batches in one MXU matmul,
        # then avg_pool1d as a matmul.  NOTE: the conv output is quantized to
        # bf16 before the pooling matmul (MXU-native); consumers needing strict
        # f32 intermediates should keep this dot in f32.
        y = jnp.dot(w, x, preferred_element_type=jnp.float32)            # (bbc, L)
        yp = jnp.dot(y.astype(jnp.bfloat16), p,
                     preferred_element_type=jnp.float32)                 # (bbc, T)
    else:
        # C_in < C_out: pool first, then conv (fewer FLOPs, same linear result).
        xp = jnp.dot(x, p, preferred_element_type=jnp.float32)           # (bb*C_in, T)
        yp = jnp.dot(w, xp.astype(jnp.bfloat16),
                     preferred_element_type=jnp.float32)                 # (bbc, T)

    # Bias added AFTER pooling (exact: every column of P sums to 1); bias,
    # gamma, beta are broadcast across the stacked batch block in-kernel.
    yp = yp + jnp.tile(b_ref[...], (bb, 1))

    # Per-batch LayerNorm over each (C_out, T) slab -- single-pass statistics.
    # One matmul with the precomputed block-averaging matrix A replaces the
    # previous 2 iota group matrices + 4 serial N<=1 f32 matmuls.
    s = jnp.sum(yp, axis=1, keepdims=True)                                # (bbc, 1)
    ss = jnp.sum(yp * yp, axis=1, keepdims=True)                          # (bbc, 1)
    stats = jnp.dot(a_ref[...], jnp.concatenate([s, ss], axis=1),
                    preferred_element_type=jnp.float32)                   # (bbc, 2)
    mu = stats[:, 0:1]
    # E[x^2] - E[x]^2 can cancel for large-mean activations; switch to a
    # two-pass variant (center, then one more A matmul) if inputs are not
    # roughly zero-mean.
    var = stats[:, 1:2] - mu * mu
    inv = lax.rsqrt(var + 1e-5)                                           # EUP slot

    out = (yp - mu) * inv * jnp.tile(g_ref[...], (bb, 1)) + jnp.tile(beta_ref[...], (bb, 1))
    o_ref[...] = out.astype(o_ref.dtype)


def _pick_batch_block(batch, c_in, c_out, max_batch_block=None):
    """Largest batch block that (a) keeps BB*C_in within the MXU contraction
    width, (b) divides the batch, and (c) keeps the x/out blocks layout-legal
    (sublane count % 8 == 0, or the block spans the whole array)."""
    if max_batch_block is None:
        # 128 fills v5e's 128x128 MXU and is still efficient on v6e/v7x
        # (256-wide); pass max_batch_block=256 // c_in to fill those fully.
        max_batch_block = max(1, 128 // max(c_in, 1))
    bb = min(batch, max_batch_block)
    while bb > 1:
        legal = (bb == batch) or ((bb * c_in) % 8 == 0 and (bb * c_out) % 8 == 0)
        if batch % bb == 0 and legal:
            return bb
        bb -= 1
    return 1


def make_fusion_down_block(w, b, gamma, beta, *, batch, length, max_batch_block=None):
    """Build the fused FusionDownBlock apply function.

    Constant-operand construction (block-diagonal W, pooling matrix P, LN
    block-averaging matrix A) is hoisted here: done once at init time instead
    of on every forward call.
    """
    C_out, C_in = w.shape
    B, L = batch, length
    T = L // C_out  # avg_pool1d floor behaviour (tail of L % C_out is dropped)
    assert gamma.shape == (C_out, T) and beta.shape == (C_out, T), \
        "LayerNorm normalized_shape must be [C_out, L // C_out]"

    BB = _pick_batch_block(B, C_in, C_out, max_batch_block)
    grid = B // BB
    # NOTE(v7x): with >= 2 grid steps the "parallel" axis lets both TensorCores
    # engage; at B == BB the grid is (1,) and one core idles (harmless here).

    # Block-diagonal conv weight so all BB batches share one MXU matmul.
    w_big = jnp.kron(jnp.eye(BB, dtype=jnp.float32),
                     w.astype(jnp.float32)).astype(jnp.bfloat16)        # (BB*C_out, BB*C_in)

    # Pooling matrix P[l, t] = 1/C_out iff t*C_out <= l < (t+1)*C_out.
    P = ((jnp.arange(L)[:, None] // C_out) == jnp.arange(T)[None, :])
    P = (P.astype(jnp.float32) / jnp.float32(C_out)).astype(jnp.bfloat16)  # (L, T)

    # LayerNorm block-averaging matrix: A[r, r'] = 1/(C_out*T) iff rows r, r'
    # belong to the same stacked batch (r // C_out == r' // C_out).
    r = jnp.arange(BB * C_out)
    A = ((r[:, None] // C_out) == (r[None, :] // C_out)).astype(jnp.float32)
    A = A / jnp.float32(C_out * T)                                       # (BB*C_out, BB*C_out)

    b_col = b.astype(jnp.float32).reshape(C_out, 1)
    gamma_f = gamma.astype(jnp.float32)
    beta_f = beta.astype(jnp.float32)

    conv_first = C_out <= C_in  # FLOP-optimal matmul order
    kernel = functools.partial(fusion_down_kernel, bb=BB, conv_first=conv_first)

    call = pl.pallas_call(
        kernel,
        out_shape=jax.ShapeDtypeStruct((B * C_out, T), jnp.float32),
        grid_spec=pltpu.PrefetchScalarGridSpec(
            num_scalar_prefetch=0,
            grid=(grid,),
            in_specs=[
                pl.BlockSpec((BB * C_in, L), lambda g: (g, 0)),            # x (f32)
                pl.BlockSpec((BB * C_out, BB * C_in), lambda g: (0, 0)),   # W_big
                pl.BlockSpec((L, T), lambda g: (0, 0)),                    # P
                pl.BlockSpec((BB * C_out, BB * C_out), lambda g: (0, 0)),  # A
                pl.BlockSpec((C_out, 1), lambda g: (0, 0)),                # bias
                pl.BlockSpec((C_out, T), lambda g: (0, 0)),                # gamma
                pl.BlockSpec((C_out, T), lambda g: (0, 0)),                # beta
            ],
            out_specs=pl.BlockSpec((BB * C_out, T), lambda g: (g, 0)),
        ),
        compiler_params=pltpu.CompilerParams(
            dimension_semantics=("parallel",)),
        # Resident working set is << 1 MiB even at BB*C_in = 256, so no
        # vmem_limit_bytes / tile shrinkage is needed on any generation.
    )

    @jax.jit
    def apply(x):
        # x stays f32 into the kernel; the bf16 cast happens on the VPU inside
        # the kernel (a wrapper-side astype would double HBM traffic on x).
        x_stack = x.reshape(B * C_in, L)
        out = call(x_stack, w_big, P, A, b_col, gamma_f, beta_f)
        return out.reshape(B, C_out, T)

    return apply


if __name__ == "__main__":
    key = jax.random.PRNGKey(0)
    # LayerNorm([C_out, 50]) forces the pooled length to be 50 => L = 50 * C_out.
    B, C_in, C_out, T = 2, 8, 4, 50
    L = C_out * T  # 200

    k1, k2, k3, k4, k5 = jax.random.split(key, 5)
    x = jax.random.normal(k1, (B, C_in, L), dtype=jnp.float32)
    w = 0.1 * jax.random.normal(k2, (C_out, C_in), dtype=jnp.float32)
    b = 0.1 * jax.random.normal(k3, (C_out,), dtype=jnp.float32)
    gamma = jnp.ones((C_out, T), jnp.float32) + 0.05 * jax.random.normal(
        k4, (C_out, T), dtype=jnp.float32)
    beta = 0.05 * jax.random.normal(k5, (C_out, T), dtype=jnp.float32)

    fusion_down = make_fusion_down_block(w, b, gamma, beta, batch=B, length=L)
    out = jax.block_until_ready(fusion_down(x))
    assert out.shape == (B, C_out, T)

    # Reference 1: exact PyTorch (pure f32) semantics. Loose tolerance accounts
    # for the bf16 MXU-input casts (~1e-2 level).
    y = jnp.einsum("oc,bcl->bol", w, x) + b[None, :, None]              # conv1d k=1
    yp = y.reshape(B, C_out, T, C_out).mean(-1)                         # avg_pool1d
    mu = yp.mean(axis=(1, 2), keepdims=True)
    var = ((yp - mu) ** 2).mean(axis=(1, 2), keepdims=True)
    ref = (yp - mu) / jnp.sqrt(var + 1e-5) * gamma[None] + beta[None]
    assert jnp.allclose(out, ref, atol=3e-2, rtol=3e-2), "mismatch vs f32 reference"

    # Reference 2: emulate the kernel's bf16 matmul inputs / intermediate -> tight check.
    y2 = jnp.einsum("oc,bcl->bol", w.astype(jnp.bfloat16), x.astype(jnp.bfloat16),
                    preferred_element_type=jnp.float32)
    y2 = y2.astype(jnp.bfloat16).astype(jnp.float32)
    yp2 = y2.reshape(B, C_out, T, C_out).mean(-1) + b[None, :, None]
    mu2 = yp2.mean(axis=(1, 2), keepdims=True)
    var2 = (yp2 * yp2).mean(axis=(1, 2), keepdims=True) - mu2 * mu2
    ref2 = (yp2 - mu2) * lax.rsqrt(var2 + 1e-5) * gamma[None] + beta[None]
    assert jnp.allclose(out, ref2, atol=5e-3, rtol=5e-3), "mismatch vs bf16-emulated reference"

    print("KERNEL_OK")
</pallas_src>

<mosaic_0001>
module attributes {stable_mosaic.version = 11 : i64} {
  func.func @fusion_down_kernel(%arg0: i32, %arg1: memref<16x200xf32, #tpu.memory_space<vmem>>, %arg2: memref<8x16xbf16, #tpu.memory_space<vmem>>, %arg3: memref<200x50xbf16, #tpu.memory_space<vmem>>, %arg4: memref<8x8xf32, #tpu.memory_space<vmem>>, %arg5: memref<4x1xf32, #tpu.memory_space<vmem>>, %arg6: memref<4x50xf32, #tpu.memory_space<vmem>>, %arg7: memref<4x50xf32, #tpu.memory_space<vmem>>, %arg8: memref<8x50xf32, #tpu.memory_space<vmem>>) attributes {dimension_semantics = [#tpu.dimension_semantics<parallel>], iteration_bounds = array<i64: 1>, scalar_prefetch = 0 : i64, scratch_operands = 0 : i64, tpu.core_type = #tpu.core_type<tc>, window_params = [{transform_indices = @transform_0, window_bounds = array<i64: 16, 200>}, {pipeline_mode = #tpu.pipeline_mode<synchronous>, transform_indices = @transform_1, window_bounds = array<i64: 8, 16>}, {pipeline_mode = #tpu.pipeline_mode<synchronous>, transform_indices = @transform_2, window_bounds = array<i64: 200, 50>}, {pipeline_mode = #tpu.pipeline_mode<synchronous>, transform_indices = @transform_3, window_bounds = array<i64: 8, 8>}, {pipeline_mode = #tpu.pipeline_mode<synchronous>, transform_indices = @transform_4, window_bounds = array<i64: 4, 1>}, {pipeline_mode = #tpu.pipeline_mode<synchronous>, transform_indices = @transform_5, window_bounds = array<i64: 4, 50>}, {pipeline_mode = #tpu.pipeline_mode<synchronous>, transform_indices = @transform_6, window_bounds = array<i64: 4, 50>}, {transform_indices = @transform_7, window_bounds = array<i64: 8, 50>}]} {
    %c0 = arith.constant 0 : index
    %c0_0 = arith.constant 0 : index
    %0 = vector.load %arg1[%c0, %c0_0] : memref<16x200xf32, #tpu.memory_space<vmem>>, vector<16x200xf32>
    %1 = arith.truncf %0 : vector<16x200xf32> to vector<16x200xbf16>
    %c0_1 = arith.constant 0 : index
    %c0_2 = arith.constant 0 : index
    %2 = vector.load %arg2[%c0_1, %c0_2] : memref<8x16xbf16, #tpu.memory_space<vmem>>, vector<8x16xbf16>
    %c0_3 = arith.constant 0 : index
    %c0_4 = arith.constant 0 : index
    %3 = vector.load %arg3[%c0_3, %c0_4] : memref<200x50xbf16, #tpu.memory_space<vmem>>, vector<200x50xbf16>
    %cst = arith.constant dense<0.000000e+00> : vector<8x200xf32>
    %4 = tpu.matmul %2, %1, %cst {dimension_numbers = #tpu.dot_dimension_numbers<[1], [0], [0], [1], [0, 0, 1, 1], [], []>} : vector<8x16xbf16>, vector<16x200xbf16>, vector<8x200xf32> -> vector<8x200xf32>
    %5 = arith.truncf %4 : vector<8x200xf32> to vector<8x200xbf16>
    %cst_5 = arith.constant dense<0.000000e+00> : vector<8x50xf32>
    %6 = tpu.matmul %5, %3, %cst_5 {dimension_numbers = #tpu.dot_dimension_numbers<[1], [0], [0], [1], [0, 0, 1, 1], [], []>} : vector<8x200xbf16>, vector<200x50xbf16>, vector<8x50xf32> -> vector<8x50xf32>
    %c0_6 = arith.constant 0 : index
    %c0_7 = arith.constant 0 : index
    %7 = vector.load %arg5[%c0_6, %c0_7] : memref<4x1xf32, #tpu.memory_space<vmem>>, vector<4x1xf32>
    %8 = tpu.concatenate %7, %7 in 0 : vector<4x1xf32>, vector<4x1xf32> -> vector<8x1xf32>
    %9 = vector.broadcast %8 : vector<8x1xf32> to vector<8x50xf32>
    %10 = arith.addf %6, %9 : vector<8x50xf32>
    %cst_8 = arith.constant dense<0.000000e+00> : vector<8xf32>
    %11 = vector.multi_reduction <add>, %10, %cst_8 [1] : vector<8x50xf32> to vector<8xf32>
    %12 = vector.shape_cast %11 : vector<8xf32> to vector<8x1xf32>
    %13 = arith.mulf %10, %10 : vector<8x50xf32>
    %cst_9 = arith.constant dense<0.000000e+00> : vector<8xf32>
    %14 = vector.multi_reduction <add>, %13, %cst_9 [1] : vector<8x50xf32> to vector<8xf32>
    %15 = vector.shape_cast %14 : vector<8xf32> to vector<8x1xf32>
    %c0_10 = arith.constant 0 : index
    %c0_11 = arith.constant 0 : index
    %16 = vector.load %arg4[%c0_10, %c0_11] : memref<8x8xf32, #tpu.memory_space<vmem>>, vector<8x8xf32>
    %17 = tpu.concatenate %12, %15 in 1 : vector<8x1xf32>, vector<8x1xf32> -> vector<8x2xf32>
    %cst_12 = arith.constant dense<0.000000e+00> : vector<8x2xf32>
    %18 = tpu.matmul %16, %17, %cst_12 {dimension_numbers = #tpu.dot_dimension_numbers<[1], [0], [0], [1], [0, 0, 1, 1], [], []>} : vector<8x8xf32>, vector<8x2xf32>, vector<8x2xf32> -> vector<8x2xf32>
    %19 = vector.extract_strided_slice %18 {offsets = [0, 0], sizes = [8, 1], strides = [1, 1]} : vector<8x2xf32> to vector<8x1xf32>
    %20 = vector.extract_strided_slice %18 {offsets = [0, 1], sizes = [8, 1], strides = [1, 1]} : vector<8x2xf32> to vector<8x1xf32>
    %21 = arith.mulf %19, %19 : vector<8x1xf32>
    %22 = arith.subf %20, %21 : vector<8x1xf32>
    %cst_13 = arith.constant 9.99999974E-6 : f32
    %23 = vector.broadcast %cst_13 : f32 to vector<8x1xf32>
    %24 = arith.addf %22, %23 : vector<8x1xf32>
    %25 = math.rsqrt %24 : vector<8x1xf32>
    %26 = vector.broadcast %19 : vector<8x1xf32> to vector<8x50xf32>
    %27 = arith.subf %10, %26 : vector<8x50xf32>
    %28 = vector.broadcast %25 : vector<8x1xf32> to vector<8x50xf32>
    %29 = arith.mulf %27, %28 : vector<8x50xf32>
    %c0_14 = arith.constant 0 : index
    %c0_15 = arith.constant 0 : index
    %30 = vector.load %arg6[%c0_14, %c0_15] : memref<4x50xf32, #tpu.memory_space<vmem>>, vector<4x50xf32>
    %31 = tpu.concatenate %30, %30 in 0 : vector<4x50xf32>, vector<4x50xf32> -> vector<8x50xf32>
    %32 = arith.mulf %29, %31 : vector<8x50xf32>
    %c0_16 = arith.constant 0 : index
    %c0_17 = arith.constant 0 : index
    %33 = vector.load %arg7[%c0_16, %c0_17] : memref<4x50xf32, #tpu.memory_space<vmem>>, vector<4x50xf32>
    %34 = tpu.concatenate %33, %33 in 0 : vector<4x50xf32>, vector<4x50xf32> -> vector<8x50xf32>
    %35 = arith.addf %32, %34 : vector<8x50xf32>
    %c0_18 = arith.constant 0 : index
    %c0_19 = arith.constant 0 : index
    %36 = vector.load %arg8[%c0_18, %c0_19] : memref<8x50xf32, #tpu.memory_space<vmem>>, vector<8x50xf32>
    tpu.vector_store %arg8[%c0_18, %c0_19], %35 {strides = array<i32>} : memref<8x50xf32, #tpu.memory_space<vmem>>, vector<8x50xf32>,
    return
  }
  func.func @transform_0(%arg0: i32) -> (i32, i32) {
    %c0_i32 = arith.constant 0 : i32
    %c0_i32_0 = arith.constant 0 : i32
    return %arg0, %c0_i32 : i32, i32
  }
  func.func @transform_1(%arg0: i32) -> (i32, i32) {
    %c0_i32 = arith.constant 0 : i32
    %c0_i32_0 = arith.constant 0 : i32
    %c0_i32_1 = arith.constant 0 : i32
    return %c0_i32, %c0_i32_0 : i32, i32
  }
  func.func @transform_2(%arg0: i32) -> (i32, i32) {
    %c0_i32 = arith.constant 0 : i32
    %c0_i32_0 = arith.constant 0 : i32
    %c0_i32_1 = arith.constant 0 : i32
    return %c0_i32, %c0_i32_0 : i32, i32
  }
  func.func @transform_3(%arg0: i32) -> (i32, i32) {
    %c0_i32 = arith.constant 0 : i32
    %c0_i32_0 = arith.constant 0 : i32
    %c0_i32_1 = arith.constant 0 : i32
    return %c0_i32, %c0_i32_0 : i32, i32
  }
  func.func @transform_4(%arg0: i32) -> (i32, i32) {
    %c0_i32 = arith.constant 0 : i32
    %c0_i32_0 = arith.constant 0 : i32
    %c0_i32_1 = arith.constant 0 : i32
    return %c0_i32, %c0_i32_0 : i32, i32
  }
  func.func @transform_5(%arg0: i32) -> (i32, i32) {
    %c0_i32 = arith.constant 0 : i32
    %c0_i32_0 = arith.constant 0 : i32
    %c0_i32_1 = arith.constant 0 : i32
    return %c0_i32, %c0_i32_0 : i32, i32
  }
  func.func @transform_6(%arg0: i32) -> (i32, i32) {
    %c0_i32 = arith.constant 0 : i32
    %c0_i32_0 = arith.constant 0 : i32
    %c0_i32_1 = arith.constant 0 : i32
    return %c0_i32, %c0_i32_0 : i32, i32
  }
  func.func @transform_7(%arg0: i32) -> (i32, i32) {
    %c0_i32 = arith.constant 0 : i32
    %c0_i32_0 = arith.constant 0 : i32
    return %arg0, %c0_i32 : i32, i32
  }
}

</mosaic_0001>

<llo_original>
// kernel: apply.1
$region0: #{apply.1}
  #allocation0 [shape = 'u32[]', space=smem, size = 0x4, offset = 0x4, fixed_abs, tag = 'smem constant byte address 0x4 - core index']
  #allocation1 [shape = 'u32[144,128]{1,0:T(1,128)}', space=vmem, size = 0x12000, scoped, tag = 'internal scratch']
  %s0 = inlined_call_operand.hbm [shape: f32[16,200], index: 0, kind: input, shape index: {}]
  %s1 = inlined_call_operand.hbm [shape: bf16[8,16], index: 1, kind: input, shape index: {}]
  %s2 = inlined_call_operand.hbm [shape: bf16[200,50], index: 2, kind: input, shape index: {}]
  %s3 = inlined_call_operand.hbm [shape: f32[8,8], index: 3, kind: input, shape index: {}]
  %s4 = inlined_call_operand.hbm [shape: f32[4,1], index: 4, kind: input, shape index: {}]
  %s5 = inlined_call_operand.vmem [shape: f32[4,50], index: 5, kind: input, shape index: {}]
  %s6 = inlined_call_operand.vmem [shape: f32[4,50], index: 6, kind: input, shape index: {}]
  %s7 = inlined_call_operand.hbm [shape: f32[8,50], index: 7, kind: output, shape index: {}]
  %s8 = sld [smem:[#allocation0]]
  $region58: #{apply.1} parent=0
    _
  %s10 = ssub.s32 1, %s8
  %s11 = scalar_select 0, %s10, %s8
  $region1: #{apply.1} parent=0
    #allocation2 [shape = 'u8[16384]{0}', space=vmem, size = 0x4000, scoped, tag = 'input window, operand 0, single buffered']
    #allocation3 [shape = 's32[1]{0}', space=sflag, size = 0x4, scoped, tag = 'scoped memory for apply.1']
    #allocation4 [shape = 's32[1]{0}', space=sflag, size = 0x4, scoped, tag = 'scoped memory for apply.1']
    #allocation5 [shape = 'u8[2048]{0}', space=vmem, size = 0x800, scoped, tag = 'input window, operand 1, single buffered']
    #allocation6 [shape = 's32[1]{0}', space=sflag, size = 0x4, scoped, tag = 'scoped memory for apply.1']
    #allocation7 [shape = 'u8[51200]{0}', space=vmem, size = 0xc800, scoped, tag = 'input window, operand 2, single buffered']
    #allocation8 [shape = 'u8[4096]{0}', space=vmem, size = 0x1000, scoped, tag = 'input window, operand 3, single buffered']
    #allocation9 [shape = 's32[1]{0}', space=sflag, size = 0x4, scoped, tag = 'scoped memory for apply.1']
    #allocation10 [shape = 'u8[2048]{0}', space=vmem, size = 0x800, scoped, tag = 'input window, operand 4, single buffered']
    #allocation11 [shape = 'u8[4096]{0}', space=vmem, size = 0x1000, scoped, tag = 'output window, operand 0, single buffered']
    %12 = vsyncpa [#allocation3], 0
    %13 = vsyncpa [#allocation6], 0
    %14 = vsyncpa [#allocation9], 0
    %15 = vsyncpa [#allocation4], 0
    // Predicated region
    $region2: #{apply.1} parent=1 // pred_check
      _
    $region3: #{apply.1} parent=1 // pred_check_branch
      %17 = sbr.rel (0) target = $region5
    $region4: #{apply.1} parent=1 // pred_region
      %s19 = ssub.s32 512, 512
      %20 = vsyncadd [#allocation3], %s19
      %s21 = sshll.u32 [#allocation2], 4
      %s22 = int_to_ptr.vmem [resolvable:$true] %s21
      %27 = dma.hbm_to_vmem [thread:$0]  %s0, 512, %s22, [#allocation3], 256, 256, 16
    $region5: #{apply.1} parent=1 // pred_fallthru
      _
    // Predicated region
    $region6: #{apply.1} parent=1 // pred_check
      _
    $region7: #{apply.1} parent=1 // pred_check_branch
      %29 = sbr.rel (0) target = $region9
    $region8: #{apply.1} parent=1 // pred_region
      %s31 = ssub.s32 64, 64
      %32 = vsyncadd [#allocation6], %s31
      %s34 = sshll.u32 [#allocation5], 4
      %s35 = int_to_ptr.vmem [resolvable:$true] %s34
      %37 = dma.hbm_to_vmem [thread:$0]  %s1, 64, %s35, [#allocation6]
    $region9: #{apply.1} parent=1 // pred_fallthru
      _
    // Predicated region
    $region10: #{apply.1} parent=1 // pred_check
      _
    $region11: #{apply.1} parent=1 // pred_check_branch
      %39 = sbr.rel (0) target = $region13
    $region12: #{apply.1} parent=1 // pred_region
      %s41 = ssub.s32 1600, 1600
      %42 = vsyncadd [#allocation6], %s41
      %s43 = sshll.u32 [#allocation7], 4
      %s44 = int_to_ptr.vmem [resolvable:$true] %s43
      %49 = dma.hbm_to_vmem [thread:$0]  %s2, 1600, %s44, [#allocation6], 64, 64, 4
    $region13: #{apply.1} parent=1 // pred_fallthru
      _
    // Predicated region
    $region14: #{apply.1} parent=1 // pred_check
      _
    $region15: #{apply.1} parent=1 // pred_check_branch
      %51 = sbr.rel (0) target = $region17
    $region16: #{apply.1} parent=1 // pred_region
      %s53 = ssub.s32 128, 128
      %54 = vsyncadd [#allocation9], %s53
      %s56 = sshll.u32 [#allocation8], 4
      %s57 = int_to_ptr.vmem [resolvable:$true] %s56
      %59 = dma.hbm_to_vmem [thread:$0]  %s3, 128, %s57, [#allocation9]
    $region17: #{apply.1} parent=1 // pred_fallthru
      _
    // Predicated region
    $region18: #{apply.1} parent=1 // pred_check
      _
    $region19: #{apply.1} parent=1 // pred_check_branch
      %61 = sbr.rel (0) target = $region21
    $region20: #{apply.1} parent=1 // pred_region
      %s63 = ssub.s32 64, 64
      %64 = vsyncadd [#allocation9], %s63
      %s66 = sshll.u32 [#allocation10], 4
      %s67 = int_to_ptr.vmem [resolvable:$true] %s66
      %69 = dma.hbm_to_vmem [thread:$0]  %s4, 64, %s67, [#allocation9]
    $region21: #{apply.1} parent=1 // pred_fallthru
      _
    // Predicated region
    $region22: #{apply.1} parent=1 // pred_check
      _
    $region23: #{apply.1} parent=1 // pred_check_branch
      %71 = sbr.rel (0) target = $region25
    $region24: #{apply.1} parent=1 // pred_region
      _
    $region25: #{apply.1} parent=1 // pred_fallthru
      _
    // Predicated region
    $region26: #{apply.1} parent=1 // pred_check
      _
    $region27: #{apply.1} parent=1 // pred_check_branch
      %73 = sbr.rel (0) target = $region29
    $region28: #{apply.1} parent=1 // pred_region
      _
    $region29: #{apply.1} parent=1 // pred_fallthru
      _
    // Predicated region
    $region30: #{apply.1} parent=1 // pred_check
      _
    $region31: #{apply.1} parent=1 // pred_check_branch
      %75 = sbr.rel (0) target = $region33
    $region32: #{apply.1} parent=1 // pred_region
      %76 = dma.done [#allocation3], 512
    $region33: #{apply.1} parent=1 // pred_fallthru
      _
    // Predicated region
    $region34: #{apply.1} parent=1 // pred_check
      _
    $region35: #{apply.1} parent=1 // pred_check_branch
      %78 = sbr.rel (0) target = $region37
    $region36: #{apply.1} parent=1 // pred_region
      %79 = dma.done [#allocation6], 64
    $region37: #{apply.1} parent=1 // pred_fallthru
      _
    // Predicated region
    $region38: #{apply.1} parent=1 // pred_check
      _
    $region39: #{apply.1} parent=1 // pred_check_branch
      %81 = sbr.rel (0) target = $region41
    $region40: #{apply.1} parent=1 // pred_region
      %82 = dma.done [#allocation6], 1600
    $region41: #{apply.1} parent=1 // pred_fallthru
      _
    // Predicated region
    $region42: #{apply.1} parent=1 // pred_check
      _
    $region43: #{apply.1} parent=1 // pred_check_branch
      %84 = sbr.rel (0) target = $region45
    $region44: #{apply.1} parent=1 // pred_region
      %85 = dma.done [#allocation9], 128
    $region45: #{apply.1} parent=1 // pred_fallthru
      _
    // Predicated region
    $region46: #{apply.1} parent=1 // pred_check
      _
    $region47: #{apply.1} parent=1 // pred_check_branch
      %87 = sbr.rel (0) target = $region49
    $region48: #{apply.1} parent=1 // pred_region
      %88 = dma.done [#allocation9], 64
    $region49: #{apply.1} parent=1 // pred_fallthru
      _
    %v90 = vld [vmem:[#allocation2] sm:$0xff]
    %v91 = vld [vmem:[#allocation2 + $0x8] sm:$0xff]
    %v92 = vld [vmem:[#allocation2 + $0x10] sm:$0xff]
    %v93 = vld [vmem:[#allocation2 + $0x18] sm:$0xff]
    %v94 = vpack.c.bf16 %v92, %v90
    %v95 = vpack.c.bf16 %v93, %v91
    %v96 = vld [vmem:[#allocation5] sm:$0xf]
    %v97 = vld [vmem:[#allocation7] sm:$0xf]
    %v98 = vld [vmem:[#allocation7 + $0x4] sm:$0xf]
    %v99 = vld [vmem:[#allocation7 + $0x8] sm:$0xf]
    %v100 = vld [vmem:[#allocation7 + $0xc] sm:$0xf]
    %v101 = vld [vmem:[#allocation7 + $0x10] sm:$0xf]
    %v102 = vld [vmem:[#allocation7 + $0x14] sm:$0xf]
    %v103 = vld [vmem:[#allocation7 + $0x18] sm:$0xf]
    %v104 = vld [vmem:[#allocation7 + $0x1c] sm:$0xf]
    %v105 = vld [vmem:[#allocation7 + $0x20] sm:$0xf]
    %v106 = vld [vmem:[#allocation7 + $0x24] sm:$0xf]
    %v107 = vld [vmem:[#allocation7 + $0x28] sm:$0xf]
    %v108 = vld [vmem:[#allocation7 + $0x2c] sm:$0xf]
    %v109 = vld [vmem:[#allocation7 + $0x30] sm:$0xf]
    %v110 = vld [vmem:[#allocation7 + $0x34] sm:$0xf]
    %v111 = vld [vmem:[#allocation7 + $0x38] sm:$0xf]
    %v112 = vld [vmem:[#allocation7 + $0x3c] sm:$0xf]
    %v113 = vld [vmem:[#allocation7 + $0x40] sm:$0xf]
    %v114 = vld [vmem:[#allocation7 + $0x44] sm:$0xf]
    %v115 = vld [vmem:[#allocation7 + $0x48] sm:$0xf]
    %v116 = vld [vmem:[#allocation7 + $0x4c] sm:$0xf]
    %v117 = vld [vmem:[#allocation7 + $0x50] sm:$0xf]
    %v118 = vld [vmem:[#allocation7 + $0x54] sm:$0xf]
    %v119 = vld [vmem:[#allocation7 + $0x58] sm:$0xf]
    %v120 = vld [vmem:[#allocation7 + $0x5c] sm:$0xf]
    %v121 = vld [vmem:[#allocation7 + $0x60] sm:$0xf]
    %vm122 = vcmask 130048
    %v124 = vsel %vm122, %v96, 0
    %126 = vmatprep.subr.bf16.mxu0 0
    %127 = vmatpush1.bf16.msra.mxu0 0
    %128 = vmatprep.subr.bf16.mxu0 0
    %129 = vmatpush1.bf16.msra.mxu0 0
    %130 = vmatprep.subr.bf16.mxu0 0
    %131 = vmatpush1.bf16.msra.mxu0 0
    %132 = vmatprep.subr.bf16.mxu0 0
    %133 = vmatpush1.bf16.msra.mxu0 0
    %134 = vmatprep.subr.bf16.mxu0 0
    %135 = vmatpush1.bf16.msra.mxu0 0
    %136 = vmatprep.subr.bf16.mxu0 0
    %137 = vmatpush1.bf16.msra.mxu0 0
    %138 = vmatprep.subr.bf16.mxu0 0
    %139 = vmatpush1.bf16.msra.mxu0 0
    %140 = vmatprep.subr.bf16.mxu0 %v95
    %141 = vmatpush1.bf16.msra.mxu0 %v94
    %142 = vmatprep.subr.bf16.mxu0 0
    %143 = vmatpush2.bf16.msra.mxu0 0
    %144 = vmatprep.subr.bf16.mxu0 0
    %145 = vmatpush2.bf16.msra.mxu0 0
    %146 = vmatprep.subr.bf16.mxu0 0
    %147 = vmatpush2.bf16.msra.mxu0 0
    %148 = vmatprep.subr.bf16.mxu0 0
    %149 = vmatpush2.bf16.msra.mxu0 0
    %150 = vmatprep.subr.bf16.mxu0 0
    %151 = vmatpush2.bf16.msra.mxu0 0
    %152 = vmatprep.subr.bf16.mxu0 0
    %153 = vmatpush2.bf16.msra.mxu0 0
    %154 = vmatprep.subr.bf16.mxu0 0
    %155 = vmatpush2.bf16.msra.mxu0 0
    %156 = vmatprep.subr.bf16.mxu0 0
    %157 = vmatpush2.bf16.msra.mxu0 0
    %158 = vmatprep.mubr.bf16.mxu0 0
    %159 = vmatmul.mubr.bf16.gmra.mxu0 %v124
    %v160 = vpop.f32.mrf.mxu0
    %v161 = vadd.f32 0.0, %v160
    %v162 = vpop.f32.mrf.mxu0
    %v163 = vadd.f32 0.0, %v162
    %v164 = vpop.f32.mrf.mxu0
    %v165 = vpop.f32.mrf.mxu0
    %166 = vdwg.mxu0
    %v167 = vpack.c.bf16 %v161, %v161
    %v168 = vpack.c.bf16 %v163, %v163
    %v169 = vld [vmem:[#allocation10] sm:$0xf]
    %v171 = vrot.slane %v169, 4
    %vm173 = vcmask 1043456
    %v174 = vsel %vm173, %v169, %v171
    %176 = vset.pattern.permute.xlu0 0
    %177 = vperm.xlu0 %176, %v174
    %v178 = vpop.permute.xlu0 %177
    %v205 = vunpack.c.l.b16 %v97
    %v206 = vunpack.c.l.b16 %v98
    %v207 = vunpack.c.l.b16 %v99
    %v208 = vunpack.c.l.b16 %v100
    %v209 = vunpack.c.l.b16 %v101
    %v210 = vunpack.c.l.b16 %v102
    %v211 = vunpack.c.l.b16 %v103
    %v212 = vunpack.c.l.b16 %v104
    %v213 = vunpack.c.l.b16 %v105
    %v214 = vunpack.c.l.b16 %v106
    %v215 = vunpack.c.l.b16 %v107
    %v216 = vunpack.c.l.b16 %v108
    %v217 = vunpack.c.l.b16 %v109
    %v218 = vunpack.c.l.b16 %v110
    %v219 = vunpack.c.l.b16 %v111
    %v220 = vunpack.c.l.b16 %v112
    %v221 = vunpack.c.l.b16 %v113
    %v222 = vunpack.c.l.b16 %v114
    %v223 = vunpack.c.l.b16 %v115
    %v224 = vunpack.c.l.b16 %v116
    %v225 = vunpack.c.l.b16 %v117
    %v226 = vunpack.c.l.b16 %v118
    %v227 = vunpack.c.l.b16 %v119
    %v228 = vunpack.c.l.b16 %v120
    %v229 = vunpack.c.l.b16 %v121
    %v230 = vpack.c.b16 %v206, %v205
    %v231 = vpack.c.b16 %v208, %v207
    %v232 = vpack.c.b16 %v210, %v209
    %v233 = vpack.c.b16 %v212, %v211
    %v234 = vpack.c.b16 %v214, %v213
    %v235 = vpack.c.b16 %v216, %v215
    %v236 = vpack.c.b16 %v218, %v217
    %v237 = vpack.c.b16 %v220, %v219
    %v238 = vpack.c.b16 %v222, %v221
    %v239 = vpack.c.b16 %v224, %v223
    %v240 = vpack.c.b16 %v226, %v225
    %v241 = vpack.c.b16 %v228, %v227
    %v242 = vpack.c.b16 %v229, %v229
    %vm255 = vcmask 588800
    %v257 = vsel %vm255, %v168, 0
    %v260 = vsel %vm173, %v242, 0
    %262 = vmatprep.subr.bf16.mxu0 0
    %263 = vmatpush1.bf16.msra.mxu0 %v237
    %264 = vmatprep.subr.bf16.mxu0 0
    %265 = vmatpush1.bf16.msra.mxu0 %v236
    %266 = vmatprep.subr.bf16.mxu0 0
    %267 = vmatpush1.bf16.msra.mxu0 %v235
    %268 = vmatprep.subr.bf16.mxu0 0
    %269 = vmatpush1.bf16.msra.mxu0 %v234
    %270 = vmatprep.subr.bf16.mxu0 0
    %271 = vmatpush1.bf16.msra.mxu0 %v233
    %272 = vmatprep.subr.bf16.mxu0 0
    %273 = vmatpush1.bf16.msra.mxu0 %v232
    %274 = vmatprep.subr.bf16.mxu0 0
    %275 = vmatpush1.bf16.msra.mxu0 %v231
    %276 = vmatprep.subr.bf16.mxu0 0
    %277 = vmatpush1.bf16.msra.mxu0 %v230
    %278 = vmatprep.subr.bf16.mxu0 0
    %279 = vmatpush2.bf16.msra.mxu0 0
    %280 = vmatprep.subr.bf16.mxu0 0
    %281 = vmatpush2.bf16.msra.mxu0 0
    %282 = vmatprep.subr.bf16.mxu0 0
    %283 = vmatpush2.bf16.msra.mxu0 0
    %284 = vmatprep.subr.bf16.mxu0 0
    %285 = vmatpush2.bf16.msra.mxu0 %v260
    %286 = vmatprep.subr.bf16.mxu0 0
    %287 = vmatpush2.bf16.msra.mxu0 %v241
    %288 = vmatprep.subr.bf16.mxu0 0
    %289 = vmatpush2.bf16.msra.mxu0 %v240
    %290 = vmatprep.subr.bf16.mxu0 0
    %291 = vmatpush2.bf16.msra.mxu0 %v239
    %292 = vmatprep.subr.bf16.mxu0 0
    %293 = vmatpush2.bf16.msra.mxu0 %v238
    %294 = vmatprep.mubr.bf16.mxu0 %v257
    %295 = vmatmul.mubr.bf16.gmra.mxu0 %v167
    %v296 = vpop.f32.mrf.mxu0
    %v297 = vadd.f32 %v178, %v296
    %v298 = vpop.f32.mrf.mxu0
    %v299 = vpop.f32.mrf.mxu0
    %v300 = vpop.f32.mrf.mxu0
    %301 = vdwg.mxu0
    %vm302 = vcmask 408576
    %v303 = vsel %vm302, %v297, 0.0
    %304 = vadd.xlane.f32.xlu0 %v303
    %v305 = vpop.xlane.xlu0 %304
    %v306 = vmul.f32 %v297, %v297
    %v307 = vsel %vm302, %v306, 0.0
    %308 = vadd.xlane.f32.xlu0 %v307
    %v309 = vpop.xlane.xlu0 %308
    %v310 = vld [vmem:[#allocation8] sm:$0xff]
    %vm311 = vcmask 7168
    %v312 = vsel %vm311, %v305, %v309
    %vm313 = vcmask 64512
    %v315 = vsel %vm313, %v310, 0
    %317 = vmatprep.subr.mxu0 0.0
    %318 = vmatpush1.msra.mxu0 0.0
    %319 = vmatprep.subr.mxu0 0.0
    %320 = vmatpush1.msra.mxu0 0.0
    %321 = vmatprep.subr.mxu0 0.0
    %322 = vmatpush1.msra.mxu0 0.0
    %323 = vmatprep.subr.mxu0 0.0
    %324 = vmatpush1.msra.mxu0 0.0
    %325 = vmatprep.subr.mxu0 0.0
    %326 = vmatpush1.msra.mxu0 0.0
    %327 = vmatprep.subr.mxu0 0.0
    %328 = vmatpush1.msra.mxu0 0.0
    %329 = vmatprep.subr.mxu0 0.0
    %330 = vmatpush1.msra.mxu0 0.0
    %331 = vmatprep.subr.mxu0 0.0
    %332 = vmatpush1.msra.mxu0 0.0
    %333 = vmatprep.subr.mxu0 0.0
    %334 = vmatpush1.msra.mxu0 0.0
    %335 = vmatprep.subr.mxu0 0.0
    %336 = vmatpush1.msra.mxu0 0.0
    %337 = vmatprep.subr.mxu0 0.0
    %338 = vmatpush1.msra.mxu0 0.0
    %339 = vmatprep.subr.mxu0 0.0
    %340 = vmatpush1.msra.mxu0 0.0
    %341 = vmatprep.subr.mxu0 0.0
    %342 = vmatpush1.msra.mxu0 0.0
    %343 = vmatprep.subr.mxu0 0.0
    %344 = vmatpush1.msra.mxu0 0.0
    %345 = vmatprep.subr.mxu0 0.0
    %346 = vmatpush1.msra.mxu0 0.0
    %347 = vmatprep.subr.mxu0 0.0
    %348 = vmatpush1.msra.mxu0 %v312
    %349 = vmatprep.subr.mxu0 0.0
    %350 = vmatpush2.msra.mxu0 0.0
    %351 = vmatprep.subr.mxu0 0.0
    %352 = vmatpush2.msra.mxu0 0.0
    %353 = vmatprep.subr.mxu0 0.0
    %354 = vmatpush2.msra.mxu0 0.0
    %355 = vmatprep.subr.mxu0 0.0
    %356 = vmatpush2.msra.mxu0 0.0
    %357 = vmatprep.subr.mxu0 0.0
    %358 = vmatpush2.msra.mxu0 0.0
    %359 = vmatprep.subr.mxu0 0.0
    %360 = vmatpush2.msra.mxu0 0.0
    %361 = vmatprep.subr.mxu0 0.0
    %362 = vmatpush2.msra.mxu0 0.0
    %363 = vmatprep.subr.mxu0 0.0
    %364 = vmatpush2.msra.mxu0 0.0
    %365 = vmatprep.subr.mxu0 0.0
    %366 = vmatpush2.msra.mxu0 0.0
    %367 = vmatprep.subr.mxu0 0.0
    %368 = vmatpush2.msra.mxu0 0.0
    %369 = vmatprep.subr.mxu0 0.0
    %370 = vmatpush2.msra.mxu0 0.0
    %371 = vmatprep.subr.mxu0 0.0
    %372 = vmatpush2.msra.mxu0 0.0
    %373 = vmatprep.subr.mxu0 0.0
    %374 = vmatpush2.msra.mxu0 0.0
    %375 = vmatprep.subr.mxu0 0.0
    %376 = vmatpush2.msra.mxu0 0.0
    %377 = vmatprep.subr.mxu0 0.0
    %378 = vmatpush2.msra.mxu0 0.0
    %379 = vmatprep.subr.mxu0 0.0
    %380 = vmatpush2.msra.mxu0 0.0
    %381 = vmatprep.mubr.f32.mxu0 0.0
    %382 = vmatmul.mubr.f32.gmra.mxu0 %v315
    %v383 = vpop.f32.mrf.mxu0
    %v384 = vadd.f32 0.0, %v383
    %v385 = vpop.f32.mrf.mxu0
    %386 = vdwg.mxu0
    %v387 = vmul.f32 %v384, %v384
    %389 = vrot.lane.b32.xlu0 %v387, 1
    %v390 = vpop.permute.xlu0 %389
    %v392 = vsub.f32 %v384, %v390
    %v393 = vadd.f32 %v392, 1e-05
    %v394 = vrsqrt.pop %v393
    %396 = vset.pattern.permute.xlu0 0
    %397 = vperm.xlu0 %396, %v384
    %v398 = vpop.permute.xlu0 %397
    %v400 = vsub.f32 %v297, %v398
    %402 = vset.pattern.permute.xlu0 1
    %403 = vperm.xlu0 %402, %v394
    %v404 = vpop.permute.xlu0 %403
    %v406 = vmul.f32 %v400, %v404
    %v407 = vld [vmem:[%s5] sm:$0xf]
    %v409 = vrot.slane %v407, 4
    %v411 = vsel %vm173, %v407, %v409
    %v412 = vmul.f32 %v406, %v411
    %v413 = vld [vmem:[%s6] sm:$0xf]
    %v415 = vrot.slane %v413, 4
    %v417 = vsel %vm173, %v413, %v415
    %v418 = vadd.f32 %v412, %v417
    %419 = vst.msk [vmem:[#allocation11] sm:$0xff] %vm302, %v418
    // Predicated region
    $region50: #{apply.1} parent=1 // pred_check
      _
    $region51: #{apply.1} parent=1 // pred_check_branch
      %421 = sbr.rel (0) target = $region53
    $region52: #{apply.1} parent=1 // pred_region
      %s423 = ssub.s32 128, 128
      %424 = vsyncadd [#allocation4], %s423
      %s426 = sshll.u32 [#allocation11], 4
      %s427 = int_to_ptr.vmem [resolvable:$true] %s426
      %429 = dma.vmem_to_hbm [thread:$0]  %s427, 128, %s7, [#allocation4]
    $region53: #{apply.1} parent=1 // pred_fallthru
      _
    // Predicated region
    $region54: #{apply.1} parent=1 // pred_check
      _
    $region55: #{apply.1} parent=1 // pred_check_branch
      %431 = sbr.rel (0) target = $region57
    $region56: #{apply.1} parent=1 // pred_region
      %432 = dma.done [#allocation4], 128
    $region57: #{apply.1} parent=1 // pred_fallthru
      _
    %433 = vsyncpa [#allocation3], 1
    %434 = vsyncpa [#allocation6], 1
    %435 = vsyncpa [#allocation9], 1
    %436 = vsyncpa [#allocation4], 1

</llo_original>
